<compile_context>
chip_gen: v7x
topology: tpu7x:2x2x1
jax: 0.10.0
libtpu: 0.0.40
codegen_flags: <defaults>
</compile_context>

<pallas_src>
import functools

import jax
import jax.numpy as jnp
from jax.experimental import pallas as pl
from jax.experimental.pallas import tpu as pltpu

NEG_SLOPE = 0.01  # F.leaky_relu default


def _leaky_relu(x):
    # max(x, a*x) == where(x > 0, x, a*x) for 0 < a < 1; one fewer VALU op per element.
    return jnp.maximum(x, NEG_SLOPE * x)


def _round_up(x, m):
    return ((x + m - 1) // m) * m


def _default_compute_dtype():
    """bf16 elementwise chain on chips with a packed-bf16 VPU (v6e/v7x), f32 otherwise."""
    try:
        kind = jax.devices()[0].device_kind.lower()
    except Exception:
        return jnp.float32
    if "v6" in kind or "v7" in kind:
        return jnp.bfloat16
    return jnp.float32  # v5e/v5p/v4: bf16 VPU is emulated -> keep f32


def _auto_tb(width):
    # Keep the (tb, width) f32 intermediate around <= 8 MiB; clamp to [512, 4096].
    tb = (8 * 1024 * 1024) // (4 * max(width, 1))
    return int(max(512, min(4096, _round_up(tb, 8))))


def hl_gauss_kernel(x_ref, w1_ref, b1_ref, w2_ref, b2_ref, w3_ref, b3_ref, o_ref):
    # Layer 1: in_features == 1, so the "matmul" is an outer product.
    # Do it as a VPU broadcast multiply-add (keeps the MXU/vex slot free).
    # Compute dtype is carried by the weight/bias dtypes (bf16 on v6e/v7x, f32 on v5e).
    x = x_ref[...].astype(w1_ref.dtype)                          # (tb, 1)
    h = _leaky_relu(x * w1_ref[...] + b1_ref[...])               # (tb, W)

    # Layer 2: bf16 operands, f32 accumulation on the MXU; bias add + activation in
    # the elementwise compute dtype.
    h = jnp.dot(h.astype(jnp.bfloat16), w2_ref[...],
                preferred_element_type=jnp.float32)
    h = _leaky_relu(h.astype(b2_ref.dtype) + b2_ref[...])        # (tb, W)

    # Layer 3: bf16 operands, f32 accumulation; bias add and store in the output dtype.
    out = jnp.dot(h.astype(jnp.bfloat16), w3_ref[...],
                  preferred_element_type=jnp.float32) + b3_ref[...]
    o_ref[...] = out.astype(o_ref.dtype)


@functools.partial(jax.jit, static_argnames=("tb", "compute_dtype", "out_dtype"))
def hl_gauss_forward(x, w1, b1, w2, b2, w3, b3, *, tb=None,
                     compute_dtype=None, out_dtype=jnp.float32):
    B = x.shape[0]
    W = w1.shape[1]
    num_bins = w3.shape[1]

    if compute_dtype is None:
        compute_dtype = _default_compute_dtype()
    if tb is None:
        tb = _auto_tb(W)

    # Batch tile: multiple of 8, never larger than the (8-rounded) batch, and -- when the
    # batch is big enough -- at least 2 grid steps so the "parallel" batch axis can shard
    # across v7x's two TensorCores.
    tb_eff = min(tb, _round_up(B, 8))
    if B > 8:
        tb_eff = min(tb_eff, _round_up(pl.cdiv(B, 2), 8))
    tb_eff = max(8, _round_up(tb_eff, 8))
    B_pad = _round_up(B, tb_eff)

    x_p = x if B_pad == B else jnp.pad(x, ((0, B_pad - B), (0, 0)))

    # Elementwise-chain params in compute_dtype; matmul weights in bf16 (f32 accumulation
    # stays in-kernel); final bias + output in f32 to preserve module semantics.
    w1_c = w1.astype(compute_dtype)
    b1_c = b1.astype(compute_dtype)
    b2_c = b2.astype(compute_dtype)
    w2_b = w2.astype(jnp.bfloat16)
    w3_b = w3.astype(jnp.bfloat16)
    b3_f = b3.astype(jnp.float32)

    grid = (B_pad // tb_eff,)
    # Weights / biases stay fully resident; constant index_map -> no re-DMA per grid step.
    full = lambda shape: pl.BlockSpec(shape, lambda i: (0, 0))

    itemsize = lambda a: jnp.dtype(a.dtype).itemsize
    flops = 2 * B_pad * (W + W * W + W * num_bins)
    bytes_accessed = (x_p.size * itemsize(x_p)
                      + B_pad * num_bins * jnp.dtype(out_dtype).itemsize
                      + w1_c.size * itemsize(w1_c) + b1_c.size * itemsize(b1_c)
                      + w2_b.size * 2 + b2_c.size * itemsize(b2_c)
                      + w3_b.size * 2 + b3_f.size * 4)
    cost = pl.CostEstimate(flops=flops, transcendentals=0,
                           bytes_accessed=int(bytes_accessed))

    out = pl.pallas_call(
        hl_gauss_kernel,
        out_shape=jax.ShapeDtypeStruct((B_pad, num_bins), out_dtype),
        grid_spec=pltpu.PrefetchScalarGridSpec(
            num_scalar_prefetch=0,
            grid=grid,
            in_specs=[
                pl.BlockSpec((tb_eff, 1), lambda i: (i, 0)),   # x tile
                full((1, W)),            # w1 (compute_dtype)
                full((1, W)),            # b1 (compute_dtype)
                full((W, W)),            # w2 (bf16)
                full((1, W)),            # b2 (compute_dtype)
                full((W, num_bins)),     # w3 (bf16)
                full((1, num_bins)),     # b3 (f32)
            ],
            out_specs=pl.BlockSpec((tb_eff, num_bins), lambda i: (i, 0)),
        ),
        compiler_params=pltpu.CompilerParams(
            dimension_semantics=("parallel",),
            # > v5e's 16 MiB default scoped VMEM; still safe within v7x's 64 MiB physical.
            vmem_limit_bytes=48 * 1024 * 1024,
        ),
        cost_estimate=cost,
    )(x_p, w1_c, b1_c, w2_b, b2_c, w3_b, b3_f)

    # No bin-column slice any more; only strip (rare) batch-padding rows.
    return out if B_pad == B else out[:B]


def init_params(key, width=128, num_bins=100):
    # Deterministic synthetic init (PyTorch-style uniform fan-in bounds),
    # stored as (in, out) so the kernel does x @ W + b.
    k = jax.random.split(key, 6)

    def uniform(k_, shape, fan_in):
        bound = 1.0 / jnp.sqrt(fan_in)
        return jax.random.uniform(k_, shape, jnp.float32, -bound, bound)

    w1 = uniform(k[0], (1, width), 1.0)
    b1 = uniform(k[1], (1, width), 1.0)
    w2 = uniform(k[2], (width, width), float(width))
    b2 = uniform(k[3], (1, width), float(width))
    w3 = uniform(k[4], (width, num_bins), float(width))
    b3 = uniform(k[5], (1, num_bins), float(width))
    return w1, b1, w2, b2, w3, b3


def reference_forward(x, w1, b1, w2, b2, w3, b3, *, compute_dtype=jnp.float32):
    # Mirrors the kernel math (same dtypes: compute_dtype elementwise chain, bf16 MXU
    # operands, f32 accumulation) so the tolerance check is apples-to-apples.
    cd = compute_dtype
    h = jax.nn.leaky_relu(x.astype(cd) * w1.astype(cd) + b1.astype(cd), NEG_SLOPE)
    h = jnp.dot(h.astype(jnp.bfloat16), w2.astype(jnp.bfloat16),
                preferred_element_type=jnp.float32)
    h = jax.nn.leaky_relu(h.astype(cd) + b2.astype(cd), NEG_SLOPE)
    return jnp.dot(h.astype(jnp.bfloat16), w3.astype(jnp.bfloat16),
                   preferred_element_type=jnp.float32) + b3.astype(jnp.float32)


if __name__ == "__main__":
    key = jax.random.PRNGKey(0)
    kx, kp = jax.random.split(key)

    batch, width, num_bins = 8, 128, 100
    x = jax.random.normal(kx, (batch, 1), jnp.float32)  # scalar regression input
    params = init_params(kp, width=width, num_bins=num_bins)

    cd = _default_compute_dtype()
    out = hl_gauss_forward(x, *params, compute_dtype=cd)
    out = jax.block_until_ready(out)

    ref = reference_forward(x, *params, compute_dtype=cd)
    tol = 1e-3 if cd == jnp.float32 else 1e-2  # bf16 elementwise chain -> looser check
    assert out.shape == (batch, num_bins)
    assert jnp.allclose(out, ref, atol=tol, rtol=tol), "mismatch vs reference"

    print("KERNEL_OK")
</pallas_src>

<mosaic_0001>
module attributes {stable_mosaic.version = 11 : i64} {
  func.func @hl_gauss_kernel(%arg0: i32, %arg1: memref<8x1xf32, #tpu.memory_space<vmem>>, %arg2: memref<1x128xf32, #tpu.memory_space<vmem>>, %arg3: memref<1x128xf32, #tpu.memory_space<vmem>>, %arg4: memref<128x128xbf16, #tpu.memory_space<vmem>>, %arg5: memref<1x128xf32, #tpu.memory_space<vmem>>, %arg6: memref<128x100xbf16, #tpu.memory_space<vmem>>, %arg7: memref<1x100xf32, #tpu.memory_space<vmem>>, %arg8: memref<8x100xf32, #tpu.memory_space<vmem>>) attributes {dimension_semantics = [#tpu.dimension_semantics<parallel>], iteration_bounds = array<i64: 1>, scalar_prefetch = 0 : i64, scratch_operands = 0 : i64, tpu.core_type = #tpu.core_type<tc>, window_params = [{transform_indices = @transform_0, window_bounds = array<i64: 8, 1>}, {pipeline_mode = #tpu.pipeline_mode<synchronous>, transform_indices = @transform_1, window_bounds = array<i64: 1, 128>}, {pipeline_mode = #tpu.pipeline_mode<synchronous>, transform_indices = @transform_2, window_bounds = array<i64: 1, 128>}, {pipeline_mode = #tpu.pipeline_mode<synchronous>, transform_indices = @transform_3, window_bounds = array<i64: 128, 128>}, {pipeline_mode = #tpu.pipeline_mode<synchronous>, transform_indices = @transform_4, window_bounds = array<i64: 1, 128>}, {pipeline_mode = #tpu.pipeline_mode<synchronous>, transform_indices = @transform_5, window_bounds = array<i64: 128, 100>}, {pipeline_mode = #tpu.pipeline_mode<synchronous>, transform_indices = @transform_6, window_bounds = array<i64: 1, 100>}, {transform_indices = @transform_7, window_bounds = array<i64: 8, 100>}]} {
    %c0 = arith.constant 0 : index
    %c0_0 = arith.constant 0 : index
    %0 = vector.load %arg1[%c0, %c0_0] : memref<8x1xf32, #tpu.memory_space<vmem>>, vector<8x1xf32>
    %c0_1 = arith.constant 0 : index
    %c0_2 = arith.constant 0 : index
    %1 = vector.load %arg2[%c0_1, %c0_2] : memref<1x128xf32, #tpu.memory_space<vmem>>, vector<1x128xf32>
    %2 = vector.broadcast %0 : vector<8x1xf32> to vector<8x128xf32>
    %3 = vector.broadcast %1 : vector<1x128xf32> to vector<8x128xf32>
    %4 = arith.mulf %2, %3 : vector<8x128xf32>
    %c0_3 = arith.constant 0 : index
    %c0_4 = arith.constant 0 : index
    %5 = vector.load %arg3[%c0_3, %c0_4] : memref<1x128xf32, #tpu.memory_space<vmem>>, vector<1x128xf32>
    %6 = vector.broadcast %5 : vector<1x128xf32> to vector<8x128xf32>
    %7 = arith.addf %4, %6 : vector<8x128xf32>
    %cst = arith.constant 0.00999999977 : f32
    %8 = vector.broadcast %cst : f32 to vector<8x128xf32>
    %9 = arith.mulf %8, %7 : vector<8x128xf32>
    %10 = arith.maximumf %7, %9 : vector<8x128xf32>
    %11 = arith.truncf %10 : vector<8x128xf32> to vector<8x128xbf16>
    %c0_5 = arith.constant 0 : index
    %c0_6 = arith.constant 0 : index
    %12 = vector.load %arg4[%c0_5, %c0_6] : memref<128x128xbf16, #tpu.memory_space<vmem>>, vector<128x128xbf16>
    %cst_7 = arith.constant dense<0.000000e+00> : vector<8x128xf32>
    %13 = tpu.matmul %11, %12, %cst_7 {dimension_numbers = #tpu.dot_dimension_numbers<[1], [0], [0], [1], [0, 0, 1, 1], [], []>} : vector<8x128xbf16>, vector<128x128xbf16>, vector<8x128xf32> -> vector<8x128xf32>
    %c0_8 = arith.constant 0 : index
    %c0_9 = arith.constant 0 : index
    %14 = vector.load %arg5[%c0_8, %c0_9] : memref<1x128xf32, #tpu.memory_space<vmem>>, vector<1x128xf32>
    %15 = vector.broadcast %14 : vector<1x128xf32> to vector<8x128xf32>
    %16 = arith.addf %13, %15 : vector<8x128xf32>
    %cst_10 = arith.constant 0.00999999977 : f32
    %17 = vector.broadcast %cst_10 : f32 to vector<8x128xf32>
    %18 = arith.mulf %17, %16 : vector<8x128xf32>
    %19 = arith.maximumf %16, %18 : vector<8x128xf32>
    %20 = arith.truncf %19 : vector<8x128xf32> to vector<8x128xbf16>
    %c0_11 = arith.constant 0 : index
    %c0_12 = arith.constant 0 : index
    %21 = vector.load %arg6[%c0_11, %c0_12] : memref<128x100xbf16, #tpu.memory_space<vmem>>, vector<128x100xbf16>
    %cst_13 = arith.constant dense<0.000000e+00> : vector<8x100xf32>
    %22 = tpu.matmul %20, %21, %cst_13 {dimension_numbers = #tpu.dot_dimension_numbers<[1], [0], [0], [1], [0, 0, 1, 1], [], []>} : vector<8x128xbf16>, vector<128x100xbf16>, vector<8x100xf32> -> vector<8x100xf32>
    %c0_14 = arith.constant 0 : index
    %c0_15 = arith.constant 0 : index
    %23 = vector.load %arg7[%c0_14, %c0_15] : memref<1x100xf32, #tpu.memory_space<vmem>>, vector<1x100xf32>
    %24 = vector.broadcast %23 : vector<1x100xf32> to vector<8x100xf32>
    %25 = arith.addf %22, %24 : vector<8x100xf32>
    %c0_16 = arith.constant 0 : index
    %c0_17 = arith.constant 0 : index
    %26 = vector.load %arg8[%c0_16, %c0_17] : memref<8x100xf32, #tpu.memory_space<vmem>>, vector<8x100xf32>
    tpu.vector_store %arg8[%c0_16, %c0_17], %25 {strides = array<i32>} : memref<8x100xf32, #tpu.memory_space<vmem>>, vector<8x100xf32>,
    return
  }
  func.func @transform_0(%arg0: i32) -> (i32, i32) {
    %c0_i32 = arith.constant 0 : i32
    %c0_i32_0 = arith.constant 0 : i32
    return %arg0, %c0_i32 : i32, i32
  }
  func.func @transform_1(%arg0: i32) -> (i32, i32) {
    %c0_i32 = arith.constant 0 : i32
    %c0_i32_0 = arith.constant 0 : i32
    %c0_i32_1 = arith.constant 0 : i32
    return %c0_i32, %c0_i32_0 : i32, i32
  }
  func.func @transform_2(%arg0: i32) -> (i32, i32) {
    %c0_i32 = arith.constant 0 : i32
    %c0_i32_0 = arith.constant 0 : i32
    %c0_i32_1 = arith.constant 0 : i32
    return %c0_i32, %c0_i32_0 : i32, i32
  }
  func.func @transform_3(%arg0: i32) -> (i32, i32) {
    %c0_i32 = arith.constant 0 : i32
    %c0_i32_0 = arith.constant 0 : i32
    %c0_i32_1 = arith.constant 0 : i32
    return %c0_i32, %c0_i32_0 : i32, i32
  }
  func.func @transform_4(%arg0: i32) -> (i32, i32) {
    %c0_i32 = arith.constant 0 : i32
    %c0_i32_0 = arith.constant 0 : i32
    %c0_i32_1 = arith.constant 0 : i32
    return %c0_i32, %c0_i32_0 : i32, i32
  }
  func.func @transform_5(%arg0: i32) -> (i32, i32) {
    %c0_i32 = arith.constant 0 : i32
    %c0_i32_0 = arith.constant 0 : i32
    %c0_i32_1 = arith.constant 0 : i32
    return %c0_i32, %c0_i32_0 : i32, i32
  }
  func.func @transform_6(%arg0: i32) -> (i32, i32) {
    %c0_i32 = arith.constant 0 : i32
    %c0_i32_0 = arith.constant 0 : i32
    %c0_i32_1 = arith.constant 0 : i32
    return %c0_i32, %c0_i32_0 : i32, i32
  }
  func.func @transform_7(%arg0: i32) -> (i32, i32) {
    %c0_i32 = arith.constant 0 : i32
    %c0_i32_0 = arith.constant 0 : i32
    return %arg0, %c0_i32 : i32, i32
  }
}

</mosaic_0001>

<llo_original>
// kernel: hl_gauss_forward.1
$region0: #{hl_gauss_forward.1}
  #allocation0 [shape = 'u32[]', space=smem, size = 0x4, offset = 0x4, fixed_abs, tag = 'smem constant byte address 0x4 - core index']
  #allocation1 [shape = 'u32[144,128]{1,0:T(1,128)}', space=vmem, size = 0x12000, scoped, tag = 'internal scratch']
  %s0 = inlined_call_operand.vmem [shape: f32[8,1], index: 0, kind: input, shape index: {}]
  %s1 = inlined_call_operand.vmem [shape: f32[1,128], index: 1, kind: input, shape index: {}]
  %s2 = inlined_call_operand.vmem [shape: f32[1,128], index: 2, kind: input, shape index: {}]
  %s3 = inlined_call_operand.vmem [shape: bf16[128,128], index: 3, kind: input, shape index: {}]
  %s4 = inlined_call_operand.vmem [shape: f32[1,128], index: 4, kind: input, shape index: {}]
  %s5 = inlined_call_operand.vmem [shape: bf16[128,100], index: 5, kind: input, shape index: {}]
  %s6 = inlined_call_operand.vmem [shape: f32[1,100], index: 6, kind: input, shape index: {}]
  %s7 = inlined_call_operand.hbm [shape: f32[8,100], index: 7, kind: output, shape index: {}]
  %s8 = sld [smem:[#allocation0]]
  $region38: #{hl_gauss_forward.1} parent=0
    _
  %s10 = ssub.s32 1, %s8
  %s11 = scalar_select 0, %s10, %s8
  $region1: #{hl_gauss_forward.1} parent=0
    #allocation2 [shape = 'u8[4096]{0}', space=vmem, size = 0x1000, scoped, tag = 'output window, operand 0, single buffered']
    #allocation3 [shape = 's32[1]{0}', space=sflag, size = 0x4, scoped, tag = 'scoped memory for hl_gauss_forward.1']
    %12 = vsyncpa [#allocation3], 0
    // Predicated region
    $region2: #{hl_gauss_forward.1} parent=1 // pred_check
      _
    $region3: #{hl_gauss_forward.1} parent=1 // pred_check_branch
      %14 = sbr.rel (0) target = $region5
    $region4: #{hl_gauss_forward.1} parent=1 // pred_region
      _
    $region5: #{hl_gauss_forward.1} parent=1 // pred_fallthru
      _
    // Predicated region
    $region6: #{hl_gauss_forward.1} parent=1 // pred_check
      _
    $region7: #{hl_gauss_forward.1} parent=1 // pred_check_branch
      %16 = sbr.rel (0) target = $region9
    $region8: #{hl_gauss_forward.1} parent=1 // pred_region
      _
    $region9: #{hl_gauss_forward.1} parent=1 // pred_fallthru
      _
    // Predicated region
    $region10: #{hl_gauss_forward.1} parent=1 // pred_check
      _
    $region11: #{hl_gauss_forward.1} parent=1 // pred_check_branch
      %18 = sbr.rel (0) target = $region13
    $region12: #{hl_gauss_forward.1} parent=1 // pred_region
      _
    $region13: #{hl_gauss_forward.1} parent=1 // pred_fallthru
      _
    // Predicated region
    $region14: #{hl_gauss_forward.1} parent=1 // pred_check
      _
    $region15: #{hl_gauss_forward.1} parent=1 // pred_check_branch
      %20 = sbr.rel (0) target = $region17
    $region16: #{hl_gauss_forward.1} parent=1 // pred_region
      _
    $region17: #{hl_gauss_forward.1} parent=1 // pred_fallthru
      _
    // Predicated region
    $region18: #{hl_gauss_forward.1} parent=1 // pred_check
      _
    $region19: #{hl_gauss_forward.1} parent=1 // pred_check_branch
      %22 = sbr.rel (0) target = $region21
    $region20: #{hl_gauss_forward.1} parent=1 // pred_region
      _
    $region21: #{hl_gauss_forward.1} parent=1 // pred_fallthru
      _
    // Predicated region
    $region22: #{hl_gauss_forward.1} parent=1 // pred_check
      _
    $region23: #{hl_gauss_forward.1} parent=1 // pred_check_branch
      %24 = sbr.rel (0) target = $region25
    $region24: #{hl_gauss_forward.1} parent=1 // pred_region
      _
    $region25: #{hl_gauss_forward.1} parent=1 // pred_fallthru
      _
    // Predicated region
    $region26: #{hl_gauss_forward.1} parent=1 // pred_check
      _
    $region27: #{hl_gauss_forward.1} parent=1 // pred_check_branch
      %26 = sbr.rel (0) target = $region29
    $region28: #{hl_gauss_forward.1} parent=1 // pred_region
      _
    $region29: #{hl_gauss_forward.1} parent=1 // pred_fallthru
      _
    %v28 = vld [vmem:[%s0] sm:$0xff]
    %v29 = vld [vmem:[%s1] sm:$0x1]
    %31 = vset.pattern.permute.xlu0 0
    %32 = vperm.xlu0 %31, %v28
    %v33 = vpop.permute.xlu0 %32
    %v36 = vlaneseq
    %v37 = vshrl.u32 %v36, 7
    %v38 = vsub.s32 0, %v37
    %v39 = vrot.slane %v29, %v38
    %v41 = vmul.f32 %v33, %v39
    %v42 = vld [vmem:[%s2] sm:$0x1]
    %v44 = vlaneseq
    %v45 = vshrl.u32 %v44, 7
    %v46 = vsub.s32 0, %v45
    %v47 = vrot.slane %v42, %v46
    %v49 = vadd.f32 %v41, %v47
    %v50 = vmul.f32 %v49, 0.01
    %v51 = vmax.f32 %v49, %v50
    %v52 = vpack.c.bf16 %v51, %v51
    %v53 = vld [vmem:[%s3] sm:$0xf]
    %v54 = vld [vmem:[%s3 + $0x4] sm:$0xf]
    %v55 = vld [vmem:[%s3 + $0x8] sm:$0xf]
    %v56 = vld [vmem:[%s3 + $0xc] sm:$0xf]
    %v57 = vld [vmem:[%s3 + $0x10] sm:$0xf]
    %v58 = vld [vmem:[%s3 + $0x14] sm:$0xf]
    %v59 = vld [vmem:[%s3 + $0x18] sm:$0xf]
    %v60 = vld [vmem:[%s3 + $0x1c] sm:$0xf]
    %v61 = vld [vmem:[%s3 + $0x20] sm:$0xf]
    %v62 = vld [vmem:[%s3 + $0x24] sm:$0xf]
    %v63 = vld [vmem:[%s3 + $0x28] sm:$0xf]
    %v64 = vld [vmem:[%s3 + $0x2c] sm:$0xf]
    %v65 = vld [vmem:[%s3 + $0x30] sm:$0xf]
    %v66 = vld [vmem:[%s3 + $0x34] sm:$0xf]
    %v67 = vld [vmem:[%s3 + $0x38] sm:$0xf]
    %v68 = vld [vmem:[%s3 + $0x3c] sm:$0xf]
    %v69 = vld [vmem:[%s4] sm:$0x1]
    %v71 = vlaneseq
    %v72 = vshrl.u32 %v71, 7
    %v73 = vsub.s32 0, %v72
    %v74 = vrot.slane %v69, %v73
    %v92 = vunpack.c.l.b16 %v53
    %v93 = vunpack.c.l.b16 %v54
    %v94 = vunpack.c.l.b16 %v55
    %v95 = vunpack.c.l.b16 %v56
    %v96 = vunpack.c.l.b16 %v57
    %v97 = vunpack.c.l.b16 %v58
    %v98 = vunpack.c.l.b16 %v59
    %v99 = vunpack.c.l.b16 %v60
    %v100 = vunpack.c.l.b16 %v61
    %v101 = vunpack.c.l.b16 %v62
    %v102 = vunpack.c.l.b16 %v63
    %v103 = vunpack.c.l.b16 %v64
    %v104 = vunpack.c.l.b16 %v65
    %v105 = vunpack.c.l.b16 %v66
    %v106 = vunpack.c.l.b16 %v67
    %v107 = vunpack.c.l.b16 %v68
    %v108 = vpack.c.b16 %v93, %v92
    %v109 = vpack.c.b16 %v95, %v94
    %v110 = vpack.c.b16 %v97, %v96
    %v111 = vpack.c.b16 %v99, %v98
    %v112 = vpack.c.b16 %v101, %v100
    %v113 = vpack.c.b16 %v103, %v102
    %v114 = vpack.c.b16 %v105, %v104
    %v115 = vpack.c.b16 %v107, %v106
    %124 = vmatprep.subr.bf16.mxu0 0
    %125 = vmatpush1.bf16.msra.mxu0 %v108
    %126 = vmatprep.subr.bf16.mxu0 0
    %127 = vmatpush1.bf16.msra.mxu0 %v109
    %128 = vmatprep.subr.bf16.mxu0 0
    %129 = vmatpush1.bf16.msra.mxu0 %v110
    %130 = vmatprep.subr.bf16.mxu0 0
    %131 = vmatpush1.bf16.msra.mxu0 %v111
    %132 = vmatprep.subr.bf16.mxu0 0
    %133 = vmatpush1.bf16.msra.mxu0 %v112
    %134 = vmatprep.subr.bf16.mxu0 0
    %135 = vmatpush1.bf16.msra.mxu0 %v113
    %136 = vmatprep.subr.bf16.mxu0 0
    %137 = vmatpush1.bf16.msra.mxu0 %v114
    %138 = vmatprep.subr.bf16.mxu0 0
    %139 = vmatpush1.bf16.msra.mxu0 %v115
    %140 = vmatprep.subr.bf16.mxu0 0
    %141 = vmatpush1.bf16.msra.mxu0 0
    %142 = vmatprep.subr.bf16.mxu0 0
    %143 = vmatpush1.bf16.msra.mxu0 0
    %144 = vmatprep.subr.bf16.mxu0 0
    %145 = vmatpush1.bf16.msra.mxu0 0
    %146 = vmatprep.subr.bf16.mxu0 0
    %147 = vmatpush1.bf16.msra.mxu0 0
    %148 = vmatprep.subr.bf16.mxu0 0
    %149 = vmatpush1.bf16.msra.mxu0 0
    %150 = vmatprep.subr.bf16.mxu0 0
    %151 = vmatpush1.bf16.msra.mxu0 0
    %152 = vmatprep.subr.bf16.mxu0 0
    %153 = vmatpush1.bf16.msra.mxu0 0
    %154 = vmatprep.subr.bf16.mxu0 0
    %155 = vmatpush1.bf16.msra.mxu0 0
    %156 = vmatprep.mubr.bf16.mxu0 0
    %157 = vmatmul.mubr.bf16.gmra.mrb[0].mxu0 %v52
    %v158 = vpop.f32.mrb[0].mxu0
    %v159 = vadd.f32 %v74, %v158
    %v160 = vpop.f32.mrb[0].mxu0
    %v161 = vpop.f32.mrb[0].mxu0
    %v162 = vpop.f32.mrb[0].mxu0
    %163 = vdwg.mxu0
    %v164 = vmul.f32 %v159, 0.01
    %v165 = vmax.f32 %v159, %v164
    %v166 = vpack.c.bf16 %v165, %v165
    %v167 = vld [vmem:[%s5] sm:$0xf]
    %v168 = vld [vmem:[%s5 + $0x4] sm:$0xf]
    %v169 = vld [vmem:[%s5 + $0x8] sm:$0xf]
    %v170 = vld [vmem:[%s5 + $0xc] sm:$0xf]
    %v171 = vld [vmem:[%s5 + $0x10] sm:$0xf]
    %v172 = vld [vmem:[%s5 + $0x14] sm:$0xf]
    %v173 = vld [vmem:[%s5 + $0x18] sm:$0xf]
    %v174 = vld [vmem:[%s5 + $0x1c] sm:$0xf]
    %v175 = vld [vmem:[%s5 + $0x20] sm:$0xf]
    %v176 = vld [vmem:[%s5 + $0x24] sm:$0xf]
    %v177 = vld [vmem:[%s5 + $0x28] sm:$0xf]
    %v178 = vld [vmem:[%s5 + $0x2c] sm:$0xf]
    %v179 = vld [vmem:[%s5 + $0x30] sm:$0xf]
    %v180 = vld [vmem:[%s5 + $0x34] sm:$0xf]
    %v181 = vld [vmem:[%s5 + $0x38] sm:$0xf]
    %v182 = vld [vmem:[%s5 + $0x3c] sm:$0xf]
    %v183 = vld [vmem:[%s6] sm:$0x1]
    %v185 = vlaneseq
    %v186 = vshrl.u32 %v185, 7
    %v187 = vsub.s32 0, %v186
    %v188 = vrot.slane %v183, %v187
    %v206 = vunpack.c.l.b16 %v167
    %v207 = vunpack.c.l.b16 %v168
    %v208 = vunpack.c.l.b16 %v169
    %v209 = vunpack.c.l.b16 %v170
    %v210 = vunpack.c.l.b16 %v171
    %v211 = vunpack.c.l.b16 %v172
    %v212 = vunpack.c.l.b16 %v173
    %v213 = vunpack.c.l.b16 %v174
    %v214 = vunpack.c.l.b16 %v175
    %v215 = vunpack.c.l.b16 %v176
    %v216 = vunpack.c.l.b16 %v177
    %v217 = vunpack.c.l.b16 %v178
    %v218 = vunpack.c.l.b16 %v179
    %v219 = vunpack.c.l.b16 %v180
    %v220 = vunpack.c.l.b16 %v181
    %v221 = vunpack.c.l.b16 %v182
    %v222 = vpack.c.b16 %v207, %v206
    %v223 = vpack.c.b16 %v209, %v208
    %v224 = vpack.c.b16 %v211, %v210
    %v225 = vpack.c.b16 %v213, %v212
    %v226 = vpack.c.b16 %v215, %v214
    %v227 = vpack.c.b16 %v217, %v216
    %v228 = vpack.c.b16 %v219, %v218
    %v229 = vpack.c.b16 %v221, %v220
    %238 = vmatprep.subr.bf16.mxu0 0
    %239 = vmatpush1.bf16.msra.mxu0 %v222
    %240 = vmatprep.subr.bf16.mxu0 0
    %241 = vmatpush1.bf16.msra.mxu0 %v223
    %242 = vmatprep.subr.bf16.mxu0 0
    %243 = vmatpush1.bf16.msra.mxu0 %v224
    %244 = vmatprep.subr.bf16.mxu0 0
    %245 = vmatpush1.bf16.msra.mxu0 %v225
    %246 = vmatprep.subr.bf16.mxu0 0
    %247 = vmatpush1.bf16.msra.mxu0 %v226
    %248 = vmatprep.subr.bf16.mxu0 0
    %249 = vmatpush1.bf16.msra.mxu0 %v227
    %250 = vmatprep.subr.bf16.mxu0 0
    %251 = vmatpush1.bf16.msra.mxu0 %v228
    %252 = vmatprep.subr.bf16.mxu0 0
    %253 = vmatpush1.bf16.msra.mxu0 %v229
    %254 = vmatprep.subr.bf16.mxu0 0
    %255 = vmatpush1.bf16.msra.mxu0 0
    %256 = vmatprep.subr.bf16.mxu0 0
    %257 = vmatpush1.bf16.msra.mxu0 0
    %258 = vmatprep.subr.bf16.mxu0 0
    %259 = vmatpush1.bf16.msra.mxu0 0
    %260 = vmatprep.subr.bf16.mxu0 0
    %261 = vmatpush1.bf16.msra.mxu0 0
    %262 = vmatprep.subr.bf16.mxu0 0
    %263 = vmatpush1.bf16.msra.mxu0 0
    %264 = vmatprep.subr.bf16.mxu0 0
    %265 = vmatpush1.bf16.msra.mxu0 0
    %266 = vmatprep.subr.bf16.mxu0 0
    %267 = vmatpush1.bf16.msra.mxu0 0
    %268 = vmatprep.subr.bf16.mxu0 0
    %269 = vmatpush1.bf16.msra.mxu0 0
    %270 = vmatprep.mubr.bf16.mxu0 0
    %271 = vmatmul.mubr.bf16.gmra.mrb[0].mxu0 %v166
    %v272 = vpop.f32.mrb[0].mxu0
    %v273 = vadd.f32 %v188, %v272
    %v274 = vpop.f32.mrb[0].mxu0
    %v275 = vpop.f32.mrb[0].mxu0
    %v276 = vpop.f32.mrb[0].mxu0
    %277 = vdwg.mxu0
    %vm278 = vcmask 818176
    %279 = vst.msk [vmem:[#allocation2] sm:$0xff] %vm278, %v273
    // Predicated region
    $region30: #{hl_gauss_forward.1} parent=1 // pred_check
      _
    $region31: #{hl_gauss_forward.1} parent=1 // pred_check_branch
      %281 = sbr.rel (0) target = $region33
    $region32: #{hl_gauss_forward.1} parent=1 // pred_region
      %s283 = ssub.s32 128, 128
      %284 = vsyncadd [#allocation3], %s283
      %s286 = sshll.u32 [#allocation2], 4
      %s287 = int_to_ptr.vmem [resolvable:$true] %s286
      %289 = dma.vmem_to_hbm [thread:$0]  %s287, 128, %s7, [#allocation3]
    $region33: #{hl_gauss_forward.1} parent=1 // pred_fallthru
      _
    // Predicated region
    $region34: #{hl_gauss_forward.1} parent=1 // pred_check
      _
    $region35: #{hl_gauss_forward.1} parent=1 // pred_check_branch
      %291 = sbr.rel (0) target = $region37
    $region36: #{hl_gauss_forward.1} parent=1 // pred_region
      %292 = dma.done [#allocation3], 128
    $region37: #{hl_gauss_forward.1} parent=1 // pred_fallthru
      _
    %293 = vsyncpa [#allocation3], 1

</llo_original>
